<compile_context>
chip_gen: v7x
topology: tpu7x:2x2x1
jax: 0.10.0
libtpu: 0.0.40
codegen_flags: <defaults>
</compile_context>

<pallas_src>
import jax
import jax.numpy as jnp
import numpy as np
from jax import lax
from jax.experimental import pallas as pl
from jax.experimental.pallas import tpu as pltpu


def _cfm_euler_kernel(t_span_ref,                     # SMEM (n_steps+1,) f32 (scalar prefetch)
                      z_ref, mu_ref, mask_ref,        # VMEM (F, BTt), (F, BTt), (1, BTt)
                      w1_ref, w2_ref, bt_ref,         # VMEM (F, F) bf16, (F, F) bf16, (F, 1) f32
                      out_ref):                       # VMEM (F, BTt) — written once at the end
    n_steps = t_span_ref.shape[0] - 1                 # static

    # ---- loop-invariant values, kept in vregs across all Euler steps ----
    w1 = w1_ref[...]                                  # (F, F) bf16
    mask = mask_ref[...]                              # (1, BTt) f32 (already f32 from wrapper)
    bt = bt_ref[...]                                  # (F, 1) f32
    # h_mu = W2 @ mu is constant across the time loop: compute once, hold in vregs.
    h_mu = jnp.dot(w2_ref[...], mu_ref[...].astype(jnp.bfloat16),
                   preferred_element_type=jnp.float32)   # (F, BTt) f32

    x0 = z_ref[...].astype(jnp.float32)               # ODE state carried in vregs (f32 accumulation)
    t0 = t_span_ref[0]
    dt0 = t_span_ref[1] - t_span_ref[0]

    def body(i, carry):
        x, t, dt = carry
        # Synthetic estimator (stands in for the abstract DiT velocity field).
        # TODO(synk): replace with the real DiT estimator once BASECFM is subclassed.
        h = jnp.dot(w1, x.astype(jnp.bfloat16),
                    preferred_element_type=jnp.float32)   # one lane-dense MXU matmul / step
        h = h + h_mu + t * bt
        dphi = jnp.tanh(h) * mask                     # f32 elementwise (v5e-safe)
        x = x + dt * dphi                              # Euler update, f32 accumulation in vregs
        t_new = t + dt
        # dt <- t_span[step + 1] - t (PyTorch `step` = i + 1).  Clamp keeps the
        # SMEM read in-bounds on the final iteration, where dt is unused.
        nxt = jnp.minimum(i + 2, n_steps)
        dt_new = t_span_ref[nxt] - t_new
        return x, t_new, dt_new

    x, _, _ = lax.fori_loop(0, n_steps, body, (x0, t0, dt0),
                            unroll=n_steps <= 8)
    out_ref[...] = x.astype(out_ref.dtype)             # single full-width store


def _pick_lane_tile(bt_cols, cap=1024):
    """Largest lane tile (multiple of 128, divides BT) up to `cap`, else full."""
    if bt_cols <= cap:
        return bt_cols
    start = cap - (cap % 128)
    for cand in range(start, 127, -128):
        if bt_cols % cand == 0:
            return cand
    return bt_cols


def cfm_forward(mu, mask, n_timesteps, w1, w2, bt, temperature=1.0, *, key,
                spks=None, cond=None):
    """Pallas equivalent of BASECFM.forward (spks/cond unused by the base-class
    estimator stub; kept for API parity)."""
    del spks, cond
    B, F, T = mu.shape
    BT = B * T

    # z = randn_like(mu) * temperature
    z = jax.random.normal(key, mu.shape, dtype=mu.dtype) * jnp.asarray(
        temperature, mu.dtype)
    if n_timesteps < 1:
        # Degenerate case: no Euler steps -> the noise sample itself.
        return z

    # t_span = linspace(0, 1, n_timesteps + 1)
    t_span = jnp.linspace(0.0, 1.0, n_timesteps + 1, dtype=jnp.float32)

    # Lane-flatten batch into the frame axis: (B, F, T) -> (F, B*T).  Columns are
    # independent under the F-contracting estimator, so this is pure layout
    # plumbing that makes every matmul and store lane-dense.
    z_flat = jnp.transpose(z, (1, 0, 2)).reshape(F, BT)
    mu_flat = jnp.transpose(mu, (1, 0, 2)).reshape(F, BT)
    mask_flat = jnp.transpose(mask.astype(jnp.float32), (1, 0, 2)).reshape(1, BT)

    # MXU operands in bf16; accumulation stays f32.
    w1b = w1.astype(jnp.bfloat16)
    w2b = w2.astype(jnp.bfloat16)
    bt2 = bt.reshape(F, 1).astype(jnp.float32)

    tile_bt = _pick_lane_tile(BT)
    grid = (BT // tile_bt,)

    grid_spec = pltpu.PrefetchScalarGridSpec(
        num_scalar_prefetch=1,
        grid=grid,
        in_specs=[
            pl.BlockSpec((F, tile_bt), lambda j, ts: (0, j)),   # z  (initial state)
            pl.BlockSpec((F, tile_bt), lambda j, ts: (0, j)),   # mu
            pl.BlockSpec((1, tile_bt), lambda j, ts: (0, j)),   # mask
            pl.BlockSpec((F, F), lambda j, ts: (0, 0)),         # w1 (bf16)
            pl.BlockSpec((F, F), lambda j, ts: (0, 0)),         # w2 (bf16)
            pl.BlockSpec((F, 1), lambda j, ts: (0, 0)),         # time bias
        ],
        out_specs=pl.BlockSpec((F, tile_bt), lambda j, ts: (0, j)),
    )

    out_flat = pl.pallas_call(
        _cfm_euler_kernel,
        out_shape=jax.ShapeDtypeStruct((F, BT), mu.dtype),
        grid_spec=grid_spec,
        # z is consumed only as the ODE initial state: alias its HBM buffer into
        # the output.  Index 1 = z_flat in the flattened arg list, which
        # includes the scalar-prefetch t_span at index 0.
        input_output_aliases={1: 0},
        compiler_params=pltpu.CompilerParams(
            dimension_semantics=("parallel",)),
    )(t_span, z_flat, mu_flat, mask_flat, w1b, w2b, bt2)

    # Back to the PyTorch layout (B, F, T).
    return jnp.transpose(out_flat.reshape(F, B, T), (1, 0, 2))


def _reference_forward(mu, mask, n_timesteps, w1, w2, bt, z):
    """Pure-JAX mirror of solve_euler with the same synthetic estimator
    (same bf16 MXU operands / f32 accumulation as the kernel)."""
    t_span = jnp.linspace(0.0, 1.0, n_timesteps + 1, dtype=jnp.float32)
    w1b = w1.astype(jnp.bfloat16)
    w2b = w2.astype(jnp.bfloat16)
    btf = bt.reshape(1, -1, 1).astype(jnp.float32)
    h_mu = jnp.einsum("fg,bgt->bft", w2b, mu.astype(jnp.bfloat16),
                      preferred_element_type=jnp.float32)
    x = z.astype(jnp.float32)
    maskf = mask.astype(jnp.float32)
    t = t_span[0]
    dt = t_span[1] - t_span[0]
    for step in range(1, n_timesteps + 1):
        h = jnp.einsum("fg,bgt->bft", w1b, x.astype(jnp.bfloat16),
                       preferred_element_type=jnp.float32)
        h = h + h_mu + t * btf
        dphi_dt = jnp.tanh(h) * maskf
        x = x + dt * dphi_dt
        t = t + dt
        if step < n_timesteps:
            dt = t_span[step + 1] - t
    return x.astype(mu.dtype)


if __name__ == "__main__":
    # BASECFM(n_feats=32, ...), n_spks=1 -> spks=None
    B, F, T = 2, 32, 128
    n_timesteps = 4
    temperature = 1.0

    key = jax.random.PRNGKey(0)
    k_mu, k_w1, k_w2, k_bt, k_z = jax.random.split(key, 5)

    mu = jax.random.normal(k_mu, (B, F, T), dtype=jnp.float32)
    # mask: (B, 1, T) with a few trailing frames masked out
    mask = jnp.concatenate(
        [jnp.ones((B, 1, T - 16), jnp.float32), jnp.zeros((B, 1, 16), jnp.float32)],
        axis=-1)

    # deterministic synthetic estimator parameters
    w1 = jax.random.normal(k_w1, (F, F), dtype=jnp.float32) * 0.1
    w2 = jax.random.normal(k_w2, (F, F), dtype=jnp.float32) * 0.1
    bt = jax.random.normal(k_bt, (1, F, 1), dtype=jnp.float32) * 0.1

    out = cfm_forward(mu, mask, n_timesteps, w1, w2, bt,
                      temperature=temperature, key=k_z)
    out = jax.block_until_ready(out)

    # correctness check vs pure-JAX reference using the same noise z
    z = jax.random.normal(k_z, mu.shape, dtype=mu.dtype) * temperature
    ref = _reference_forward(mu, mask, n_timesteps, w1, w2, bt, z)
    np.testing.assert_allclose(np.asarray(out), np.asarray(ref),
                               rtol=1e-2, atol=1e-2)

    print("KERNEL_OK")
</pallas_src>

<mosaic_0001>
module attributes {stable_mosaic.version = 11 : i64} {
  func.func @_cfm_euler_kernel(%arg0: i32, %arg1: memref<5xf32, #tpu.memory_space<smem>>, %arg2: memref<32x256xf32, #tpu.memory_space<vmem>>, %arg3: memref<32x256xf32, #tpu.memory_space<vmem>>, %arg4: memref<1x256xf32, #tpu.memory_space<vmem>>, %arg5: memref<32x32xbf16, #tpu.memory_space<vmem>>, %arg6: memref<32x32xbf16, #tpu.memory_space<vmem>>, %arg7: memref<32x1xf32, #tpu.memory_space<vmem>>, %arg8: memref<32x256xf32, #tpu.memory_space<vmem>>) attributes {dimension_semantics = [#tpu.dimension_semantics<parallel>], iteration_bounds = array<i64: 1>, scalar_prefetch = 1 : i64, scratch_operands = 0 : i64, tpu.core_type = #tpu.core_type<tc>, window_params = [{transform_indices = @transform_0, window_bounds = array<i64: 32, 256>}, {transform_indices = @transform_1, window_bounds = array<i64: 32, 256>}, {transform_indices = @transform_2, window_bounds = array<i64: 1, 256>}, {pipeline_mode = #tpu.pipeline_mode<synchronous>, transform_indices = @transform_3, window_bounds = array<i64: 32, 32>}, {pipeline_mode = #tpu.pipeline_mode<synchronous>, transform_indices = @transform_4, window_bounds = array<i64: 32, 32>}, {pipeline_mode = #tpu.pipeline_mode<synchronous>, transform_indices = @transform_5, window_bounds = array<i64: 32, 1>}, {transform_indices = @transform_6, window_bounds = array<i64: 32, 256>}]} {
    %c0 = arith.constant 0 : index
    %c0_0 = arith.constant 0 : index
    %0 = vector.load %arg5[%c0, %c0_0] : memref<32x32xbf16, #tpu.memory_space<vmem>>, vector<32x32xbf16>
    %c0_1 = arith.constant 0 : index
    %c0_2 = arith.constant 0 : index
    %1 = vector.load %arg4[%c0_1, %c0_2] : memref<1x256xf32, #tpu.memory_space<vmem>>, vector<1x256xf32>
    %c0_3 = arith.constant 0 : index
    %c0_4 = arith.constant 0 : index
    %2 = vector.load %arg7[%c0_3, %c0_4] : memref<32x1xf32, #tpu.memory_space<vmem>>, vector<32x1xf32>
    %c0_5 = arith.constant 0 : index
    %c0_6 = arith.constant 0 : index
    %3 = vector.load %arg6[%c0_5, %c0_6] : memref<32x32xbf16, #tpu.memory_space<vmem>>, vector<32x32xbf16>
    %c0_7 = arith.constant 0 : index
    %c0_8 = arith.constant 0 : index
    %4 = vector.load %arg3[%c0_7, %c0_8] : memref<32x256xf32, #tpu.memory_space<vmem>>, vector<32x256xf32>
    %5 = arith.truncf %4 : vector<32x256xf32> to vector<32x256xbf16>
    %cst = arith.constant dense<0.000000e+00> : vector<32x256xf32>
    %6 = tpu.matmul %3, %5, %cst {dimension_numbers = #tpu.dot_dimension_numbers<[1], [0], [0], [1], [0, 0, 1, 1], [], []>} : vector<32x32xbf16>, vector<32x256xbf16>, vector<32x256xf32> -> vector<32x256xf32>
    %c0_9 = arith.constant 0 : index
    %c0_10 = arith.constant 0 : index
    %7 = vector.load %arg2[%c0_9, %c0_10] : memref<32x256xf32, #tpu.memory_space<vmem>>, vector<32x256xf32>
    %c0_11 = arith.constant 0 : index
    %8 = memref.load %arg1[%c0_11] : memref<5xf32, #tpu.memory_space<smem>>
    %c1 = arith.constant 1 : index
    %9 = memref.load %arg1[%c1] : memref<5xf32, #tpu.memory_space<smem>>
    %c0_12 = arith.constant 0 : index
    %10 = memref.load %arg1[%c0_12] : memref<5xf32, #tpu.memory_space<smem>>
    %11 = arith.subf %9, %10 : f32
    %c0_i32 = arith.constant 0 : i32
    %12 = arith.truncf %7 : vector<32x256xf32> to vector<32x256xbf16>
    %cst_13 = arith.constant dense<0.000000e+00> : vector<32x256xf32>
    %13 = tpu.matmul %0, %12, %cst_13 {dimension_numbers = #tpu.dot_dimension_numbers<[1], [0], [0], [1], [0, 0, 1, 1], [], []>} : vector<32x32xbf16>, vector<32x256xbf16>, vector<32x256xf32> -> vector<32x256xf32>
    %14 = arith.addf %13, %6 : vector<32x256xf32>
    %15 = vector.broadcast %8 : f32 to vector<32x1xf32>
    %16 = arith.mulf %15, %2 : vector<32x1xf32>
    %17 = vector.broadcast %16 : vector<32x1xf32> to vector<32x256xf32>
    %18 = arith.addf %14, %17 : vector<32x256xf32>
    %19 = math.tanh %18 : vector<32x256xf32>
    %20 = vector.broadcast %1 : vector<1x256xf32> to vector<32x256xf32>
    %21 = arith.mulf %19, %20 : vector<32x256xf32>
    %22 = vector.broadcast %11 : f32 to vector<32x256xf32>
    %23 = arith.mulf %22, %21 : vector<32x256xf32>
    %24 = arith.addf %7, %23 : vector<32x256xf32>
    %25 = arith.addf %8, %11 : f32
    %c2_i32 = arith.constant 2 : i32
    %26 = arith.addi %c0_i32, %c2_i32 : i32
    %c4_i32 = arith.constant 4 : i32
    %27 = arith.minsi %26, %c4_i32 : i32
    %28 = arith.index_cast %27 : i32 to index
    %29 = memref.load %arg1[%28] : memref<5xf32, #tpu.memory_space<smem>>
    %30 = arith.subf %29, %25 : f32
    %c1_i32 = arith.constant 1 : i32
    %31 = arith.truncf %24 : vector<32x256xf32> to vector<32x256xbf16>
    %cst_14 = arith.constant dense<0.000000e+00> : vector<32x256xf32>
    %32 = tpu.matmul %0, %31, %cst_14 {dimension_numbers = #tpu.dot_dimension_numbers<[1], [0], [0], [1], [0, 0, 1, 1], [], []>} : vector<32x32xbf16>, vector<32x256xbf16>, vector<32x256xf32> -> vector<32x256xf32>
    %33 = arith.addf %32, %6 : vector<32x256xf32>
    %34 = vector.broadcast %25 : f32 to vector<32x1xf32>
    %35 = arith.mulf %34, %2 : vector<32x1xf32>
    %36 = vector.broadcast %35 : vector<32x1xf32> to vector<32x256xf32>
    %37 = arith.addf %33, %36 : vector<32x256xf32>
    %38 = math.tanh %37 : vector<32x256xf32>
    %39 = vector.broadcast %1 : vector<1x256xf32> to vector<32x256xf32>
    %40 = arith.mulf %38, %39 : vector<32x256xf32>
    %41 = vector.broadcast %30 : f32 to vector<32x256xf32>
    %42 = arith.mulf %41, %40 : vector<32x256xf32>
    %43 = arith.addf %24, %42 : vector<32x256xf32>
    %44 = arith.addf %25, %30 : f32
    %c2_i32_15 = arith.constant 2 : i32
    %45 = arith.addi %c1_i32, %c2_i32_15 : i32
    %c4_i32_16 = arith.constant 4 : i32
    %46 = arith.minsi %45, %c4_i32_16 : i32
    %47 = arith.index_cast %46 : i32 to index
    %48 = memref.load %arg1[%47] : memref<5xf32, #tpu.memory_space<smem>>
    %49 = arith.subf %48, %44 : f32
    %c2_i32_17 = arith.constant 2 : i32
    %50 = arith.truncf %43 : vector<32x256xf32> to vector<32x256xbf16>
    %cst_18 = arith.constant dense<0.000000e+00> : vector<32x256xf32>
    %51 = tpu.matmul %0, %50, %cst_18 {dimension_numbers = #tpu.dot_dimension_numbers<[1], [0], [0], [1], [0, 0, 1, 1], [], []>} : vector<32x32xbf16>, vector<32x256xbf16>, vector<32x256xf32> -> vector<32x256xf32>
    %52 = arith.addf %51, %6 : vector<32x256xf32>
    %53 = vector.broadcast %44 : f32 to vector<32x1xf32>
    %54 = arith.mulf %53, %2 : vector<32x1xf32>
    %55 = vector.broadcast %54 : vector<32x1xf32> to vector<32x256xf32>
    %56 = arith.addf %52, %55 : vector<32x256xf32>
    %57 = math.tanh %56 : vector<32x256xf32>
    %58 = vector.broadcast %1 : vector<1x256xf32> to vector<32x256xf32>
    %59 = arith.mulf %57, %58 : vector<32x256xf32>
    %60 = vector.broadcast %49 : f32 to vector<32x256xf32>
    %61 = arith.mulf %60, %59 : vector<32x256xf32>
    %62 = arith.addf %43, %61 : vector<32x256xf32>
    %63 = arith.addf %44, %49 : f32
    %c2_i32_19 = arith.constant 2 : i32
    %64 = arith.addi %c2_i32_17, %c2_i32_19 : i32
    %c4_i32_20 = arith.constant 4 : i32
    %65 = arith.minsi %64, %c4_i32_20 : i32
    %66 = arith.index_cast %65 : i32 to index
    %67 = memref.load %arg1[%66] : memref<5xf32, #tpu.memory_space<smem>>
    %68 = arith.subf %67, %63 : f32
    %c3_i32 = arith.constant 3 : i32
    %69 = arith.truncf %62 : vector<32x256xf32> to vector<32x256xbf16>
    %cst_21 = arith.constant dense<0.000000e+00> : vector<32x256xf32>
    %70 = tpu.matmul %0, %69, %cst_21 {dimension_numbers = #tpu.dot_dimension_numbers<[1], [0], [0], [1], [0, 0, 1, 1], [], []>} : vector<32x32xbf16>, vector<32x256xbf16>, vector<32x256xf32> -> vector<32x256xf32>
    %71 = arith.addf %70, %6 : vector<32x256xf32>
    %72 = vector.broadcast %63 : f32 to vector<32x1xf32>
    %73 = arith.mulf %72, %2 : vector<32x1xf32>
    %74 = vector.broadcast %73 : vector<32x1xf32> to vector<32x256xf32>
    %75 = arith.addf %71, %74 : vector<32x256xf32>
    %76 = math.tanh %75 : vector<32x256xf32>
    %77 = vector.broadcast %1 : vector<1x256xf32> to vector<32x256xf32>
    %78 = arith.mulf %76, %77 : vector<32x256xf32>
    %79 = vector.broadcast %68 : f32 to vector<32x256xf32>
    %80 = arith.mulf %79, %78 : vector<32x256xf32>
    %81 = arith.addf %62, %80 : vector<32x256xf32>
    %82 = arith.addf %63, %68 : f32
    %c2_i32_22 = arith.constant 2 : i32
    %83 = arith.addi %c3_i32, %c2_i32_22 : i32
    %c4_i32_23 = arith.constant 4 : i32
    %84 = arith.minsi %83, %c4_i32_23 : i32
    %85 = arith.index_cast %84 : i32 to index
    %86 = memref.load %arg1[%85] : memref<5xf32, #tpu.memory_space<smem>>
    %87 = arith.subf %86, %82 : f32
    %c4_i32_24 = arith.constant 4 : i32
    %c0_25 = arith.constant 0 : index
    %c0_26 = arith.constant 0 : index
    %88 = vector.load %arg8[%c0_25, %c0_26] : memref<32x256xf32, #tpu.memory_space<vmem>>, vector<32x256xf32>
    tpu.vector_store %arg8[%c0_25, %c0_26], %81 {strides = array<i32>} : memref<32x256xf32, #tpu.memory_space<vmem>>, vector<32x256xf32>,
    return
  }
  func.func @transform_0(%arg0: i32, %arg1: memref<5xf32, #tpu.memory_space<smem>>) -> (i32, i32) {
    %c0_i32 = arith.constant 0 : i32
    %c0_i32_0 = arith.constant 0 : i32
    return %c0_i32, %arg0 : i32, i32
  }
  func.func @transform_1(%arg0: i32, %arg1: memref<5xf32, #tpu.memory_space<smem>>) -> (i32, i32) {
    %c0_i32 = arith.constant 0 : i32
    %c0_i32_0 = arith.constant 0 : i32
    return %c0_i32, %arg0 : i32, i32
  }
  func.func @transform_2(%arg0: i32, %arg1: memref<5xf32, #tpu.memory_space<smem>>) -> (i32, i32) {
    %c0_i32 = arith.constant 0 : i32
    %c0_i32_0 = arith.constant 0 : i32
    return %c0_i32, %arg0 : i32, i32
  }
  func.func @transform_3(%arg0: i32, %arg1: memref<5xf32, #tpu.memory_space<smem>>) -> (i32, i32) {
    %c0_i32 = arith.constant 0 : i32
    %c0_i32_0 = arith.constant 0 : i32
    %c0_i32_1 = arith.constant 0 : i32
    return %c0_i32, %c0_i32_0 : i32, i32
  }
  func.func @transform_4(%arg0: i32, %arg1: memref<5xf32, #tpu.memory_space<smem>>) -> (i32, i32) {
    %c0_i32 = arith.constant 0 : i32
    %c0_i32_0 = arith.constant 0 : i32
    %c0_i32_1 = arith.constant 0 : i32
    return %c0_i32, %c0_i32_0 : i32, i32
  }
  func.func @transform_5(%arg0: i32, %arg1: memref<5xf32, #tpu.memory_space<smem>>) -> (i32, i32) {
    %c0_i32 = arith.constant 0 : i32
    %c0_i32_0 = arith.constant 0 : i32
    %c0_i32_1 = arith.constant 0 : i32
    return %c0_i32, %c0_i32_0 : i32, i32
  }
  func.func @transform_6(%arg0: i32, %arg1: memref<5xf32, #tpu.memory_space<smem>>) -> (i32, i32) {
    %c0_i32 = arith.constant 0 : i32
    %c0_i32_0 = arith.constant 0 : i32
    return %c0_i32, %arg0 : i32, i32
  }
}

</mosaic_0001>

<llo_original>
// kernel: tpu_custom_call.1
$region0: #{tpu_custom_call.1}
  #allocation0 [shape = 'u32[]', space=smem, size = 0x4, offset = 0x4, fixed_abs, tag = 'smem constant byte address 0x4 - core index']
  #allocation1 [shape = 'u32[144,128]{1,0:T(1,128)}', space=vmem, size = 0x12000, scoped, tag = 'internal scratch']
  #allocation2 [shape = 's32[1]{0}', space=sflag, size = 0x4, scoped, tag = 'scoped memory for tpu_custom_call.1']
  #allocation3 [shape = 'u8[512]{0}', space=smem, size = 0x200, scoped, tag = 'prefetched SMEM operand 0']
  %s0 = inlined_call_operand.vmem [shape: f32[5], index: 0, kind: input, shape index: {}]
  %s1 = inlined_call_operand.hbm [shape: f32[32,256], index: 1, kind: input, shape index: {}, may-alias: {1,7}]
  %s2 = inlined_call_operand.vmem [shape: f32[32,256], index: 2, kind: input, shape index: {}]
  %s3 = inlined_call_operand.vmem [shape: f32[1,256], index: 3, kind: input, shape index: {}]
  %s4 = inlined_call_operand.vmem [shape: bf16[32,32], index: 4, kind: input, shape index: {}]
  %s5 = inlined_call_operand.vmem [shape: bf16[32,32], index: 5, kind: input, shape index: {}]
  %s6 = inlined_call_operand.vmem [shape: f32[32,1], index: 6, kind: input, shape index: {}]
  %s7 = inlined_call_operand.hbm [shape: f32[32,256], index: 7, kind: output, shape index: {}, may-alias: {1,7}]
  %s8 = sld [smem:[#allocation0]]
  $region38: #{tpu_custom_call.1} parent=0
    _
  %s10 = ssub.s32 1, %s8
  %s11 = scalar_select 0, %s10, %s8
  %s12 = sshll.u32 %s0, 4
  %s13 = int_to_ptr.vmem [resolvable:$true] %s12
  %15 = dma.vmem_to_smem %s13, 16, [#allocation3], [#allocation2]
  %16 = dma.done [#allocation2], 16
  %17 = sfence
  $region1: #{tpu_custom_call.1} parent=0
    #allocation4 [shape = 'u8[32768]{0}', space=vmem, size = 0x8000, scoped, tag = 'input window, operand 1, single buffered']
    #allocation5 [shape = 's32[1]{0}', space=sflag, size = 0x4, scoped, tag = 'scoped memory for tpu_custom_call.1']
    #allocation6 [shape = 's32[1]{0}', space=sflag, size = 0x4, scoped, tag = 'scoped memory for tpu_custom_call.1']
    #allocation7 [shape = 'u8[32768]{0}', space=vmem, size = 0x8000, scoped, tag = 'output window, operand 0, single buffered']
    %18 = vsyncpa [#allocation5], 0
    %19 = vsyncpa [#allocation6], 0
    // Predicated region
    $region2: #{tpu_custom_call.1} parent=1 // pred_check
      _
    $region3: #{tpu_custom_call.1} parent=1 // pred_check_branch
      %21 = sbr.rel (0) target = $region5
    $region4: #{tpu_custom_call.1} parent=1 // pred_region
      %s23 = ssub.s32 1024, 1024
      %24 = vsyncadd [#allocation5], %s23
      %s25 = sshll.u32 [#allocation4], 4
      %s26 = int_to_ptr.vmem [resolvable:$true] %s25
      %31 = dma.hbm_to_vmem [thread:$0]  %s1, 1024, %s26, [#allocation5], 256, 256, 16
    $region5: #{tpu_custom_call.1} parent=1 // pred_fallthru
      _
    // Predicated region
    $region6: #{tpu_custom_call.1} parent=1 // pred_check
      _
    $region7: #{tpu_custom_call.1} parent=1 // pred_check_branch
      %33 = sbr.rel (0) target = $region9
    $region8: #{tpu_custom_call.1} parent=1 // pred_region
      _
    $region9: #{tpu_custom_call.1} parent=1 // pred_fallthru
      _
    // Predicated region
    $region10: #{tpu_custom_call.1} parent=1 // pred_check
      _
    $region11: #{tpu_custom_call.1} parent=1 // pred_check_branch
      %35 = sbr.rel (0) target = $region13
    $region12: #{tpu_custom_call.1} parent=1 // pred_region
      _
    $region13: #{tpu_custom_call.1} parent=1 // pred_fallthru
      _
    // Predicated region
    $region14: #{tpu_custom_call.1} parent=1 // pred_check
      _
    $region15: #{tpu_custom_call.1} parent=1 // pred_check_branch
      %37 = sbr.rel (0) target = $region17
    $region16: #{tpu_custom_call.1} parent=1 // pred_region
      _
    $region17: #{tpu_custom_call.1} parent=1 // pred_fallthru
      _
    // Predicated region
    $region18: #{tpu_custom_call.1} parent=1 // pred_check
      _
    $region19: #{tpu_custom_call.1} parent=1 // pred_check_branch
      %39 = sbr.rel (0) target = $region21
    $region20: #{tpu_custom_call.1} parent=1 // pred_region
      _
    $region21: #{tpu_custom_call.1} parent=1 // pred_fallthru
      _
    // Predicated region
    $region22: #{tpu_custom_call.1} parent=1 // pred_check
      _
    $region23: #{tpu_custom_call.1} parent=1 // pred_check_branch
      %41 = sbr.rel (0) target = $region25
    $region24: #{tpu_custom_call.1} parent=1 // pred_region
      _
    $region25: #{tpu_custom_call.1} parent=1 // pred_fallthru
      _
    // Predicated region
    $region26: #{tpu_custom_call.1} parent=1 // pred_check
      _
    $region27: #{tpu_custom_call.1} parent=1 // pred_check_branch
      %43 = sbr.rel (0) target = $region29
    $region28: #{tpu_custom_call.1} parent=1 // pred_region
      %44 = dma.done [#allocation5], 1024
    $region29: #{tpu_custom_call.1} parent=1 // pred_fallthru
      _
    %v46 = vld [vmem:[%s4] sm:$0xf]
    %v47 = vld [vmem:[%s4 + $0x4] sm:$0xf]
    %v48 = vld [vmem:[%s4 + $0x8] sm:$0xf]
    %v49 = vld [vmem:[%s4 + $0xc] sm:$0xf]
    %v50 = vld [vmem:[%s3] sm:$0x3]
    %v51 = vld [vmem:[%s6] sm:$0xff]
    %v52 = vld [vmem:[%s6 + $0x8] sm:$0xff]
    %v53 = vld [vmem:[%s6 + $0x10] sm:$0xff]
    %v54 = vld [vmem:[%s6 + $0x18] sm:$0xff]
    %v55 = vld [vmem:[%s5] sm:$0xf]
    %v56 = vld [vmem:[%s5 + $0x4] sm:$0xf]
    %v57 = vld [vmem:[%s5 + $0x8] sm:$0xf]
    %v58 = vld [vmem:[%s5 + $0xc] sm:$0xf]
    %v59 = vld [vmem:[%s2] sm:$0xff]
    %v60 = vld [vmem:[%s2 + $0x8] sm:$0xff]
    %v61 = vld [vmem:[%s2 + $0x10] sm:$0xff]
    %v62 = vld [vmem:[%s2 + $0x18] sm:$0xff]
    %v63 = vld [vmem:[%s2 + $0x20] sm:$0xff]
    %v64 = vld [vmem:[%s2 + $0x28] sm:$0xff]
    %v65 = vld [vmem:[%s2 + $0x30] sm:$0xff]
    %v66 = vld [vmem:[%s2 + $0x38] sm:$0xff]
    %v67 = vpack.c.bf16 %v61, %v59
    %v68 = vpack.c.bf16 %v62, %v60
    %v69 = vpack.c.bf16 %v65, %v63
    %v70 = vpack.c.bf16 %v66, %v64
    %v75 = vunpack.c.l.b16 %v55
    %v76 = vunpack.c.l.b16 %v56
    %v77 = vunpack.c.l.b16 %v57
    %v78 = vunpack.c.l.b16 %v58
    %v79 = vpack.c.b16 %v76, %v75
    %v80 = vpack.c.b16 %v78, %v77
    %vm81 = vcmask 261120
    %v83 = vsel %vm81, %v79, 0
    %v86 = vsel %vm81, %v80, 0
    %88 = vmatprep.subr.bf16.mxu0 %v68
    %89 = vmatpush1.bf16.msra.mxu0 %v67
    %90 = vmatprep.subr.bf16.mxu0 %v70
    %91 = vmatpush1.bf16.msra.mxu0 %v69
    %92 = vmatprep.subr.bf16.mxu0 0
    %93 = vmatpush1.bf16.msra.mxu0 0
    %94 = vmatprep.subr.bf16.mxu0 0
    %95 = vmatpush1.bf16.msra.mxu0 0
    %96 = vmatprep.subr.bf16.mxu0 0
    %97 = vmatpush1.bf16.msra.mxu0 0
    %98 = vmatprep.subr.bf16.mxu0 0
    %99 = vmatpush1.bf16.msra.mxu0 0
    %100 = vmatprep.subr.bf16.mxu0 0
    %101 = vmatpush1.bf16.msra.mxu0 0
    %102 = vmatprep.subr.bf16.mxu0 0
    %103 = vmatpush1.bf16.msra.mxu0 0
    %104 = vmatprep.subr.bf16.mxu0 0
    %105 = vmatpush1.bf16.msra.mxu0 0
    %106 = vmatprep.subr.bf16.mxu0 0
    %107 = vmatpush1.bf16.msra.mxu0 0
    %108 = vmatprep.subr.bf16.mxu0 0
    %109 = vmatpush1.bf16.msra.mxu0 0
    %110 = vmatprep.subr.bf16.mxu0 0
    %111 = vmatpush1.bf16.msra.mxu0 0
    %112 = vmatprep.subr.bf16.mxu0 0
    %113 = vmatpush1.bf16.msra.mxu0 0
    %114 = vmatprep.subr.bf16.mxu0 0
    %115 = vmatpush1.bf16.msra.mxu0 0
    %116 = vmatprep.subr.bf16.mxu0 0
    %117 = vmatpush1.bf16.msra.mxu0 0
    %118 = vmatprep.subr.bf16.mxu0 0
    %119 = vmatpush1.bf16.msra.mxu0 0
    %120 = vmatprep.mubr.bf16.mxu0 0
    %121 = vmatmul.mubr.bf16.gmra.mrb[0].mxu0 %v83
    %v122 = vpop.f32.mrb[0].mxu0
    %v123 = vadd.f32 0.0, %v122
    %v124 = vpop.f32.mrb[0].mxu0
    %v125 = vadd.f32 0.0, %v124
    %v126 = vpop.f32.mrb[0].mxu0
    %v127 = vadd.f32 0.0, %v126
    %v128 = vpop.f32.mrb[0].mxu0
    %v129 = vadd.f32 0.0, %v128
    %130 = vmatprep.mubr.bf16.mxu0 0
    %131 = vmatmul.mubr.bf16.gmra.mrb[0].mxu0 %v86
    %v132 = vpop.f32.mrb[0].mxu0
    %v133 = vadd.f32 0.0, %v132
    %v134 = vpop.f32.mrb[0].mxu0
    %v135 = vadd.f32 0.0, %v134
    %v136 = vpop.f32.mrb[0].mxu0
    %v137 = vadd.f32 0.0, %v136
    %v138 = vpop.f32.mrb[0].mxu0
    %v139 = vadd.f32 0.0, %v138
    %140 = vdwg.mxu0
    %v141 = vld [vmem:[#allocation4] sm:$0xff]
    %v142 = vld [vmem:[#allocation4 + $0x8] sm:$0xff]
    %v143 = vld [vmem:[#allocation4 + $0x10] sm:$0xff]
    %v144 = vld [vmem:[#allocation4 + $0x18] sm:$0xff]
    %v145 = vld [vmem:[#allocation4 + $0x20] sm:$0xff]
    %v146 = vld [vmem:[#allocation4 + $0x28] sm:$0xff]
    %v147 = vld [vmem:[#allocation4 + $0x30] sm:$0xff]
    %v148 = vld [vmem:[#allocation4 + $0x38] sm:$0xff]
    %s149 = sld [smem:[#allocation3]]
    %s150 = sld [smem:[#allocation3 + $0x1]]
    %s151 = ssub.f32 %s150, %s149
    %v152 = vpack.c.bf16 %v143, %v141
    %v153 = vpack.c.bf16 %v144, %v142
    %v154 = vpack.c.bf16 %v147, %v145
    %v155 = vpack.c.bf16 %v148, %v146
    %v160 = vunpack.c.l.b16 %v46
    %v161 = vunpack.c.l.b16 %v47
    %v162 = vunpack.c.l.b16 %v48
    %v163 = vunpack.c.l.b16 %v49
    %v164 = vpack.c.b16 %v161, %v160
    %v165 = vpack.c.b16 %v163, %v162
    %v167 = vsel %vm81, %v164, 0
    %v170 = vsel %vm81, %v165, 0
    %172 = vmatprep.subr.bf16.mxu0 %v153
    %173 = vmatpush1.bf16.msra.mxu0 %v152
    %174 = vmatprep.subr.bf16.mxu0 %v155
    %175 = vmatpush1.bf16.msra.mxu0 %v154
    %176 = vmatprep.subr.bf16.mxu0 0
    %177 = vmatpush1.bf16.msra.mxu0 0
    %178 = vmatprep.subr.bf16.mxu0 0
    %179 = vmatpush1.bf16.msra.mxu0 0
    %180 = vmatprep.subr.bf16.mxu0 0
    %181 = vmatpush1.bf16.msra.mxu0 0
    %182 = vmatprep.subr.bf16.mxu0 0
    %183 = vmatpush1.bf16.msra.mxu0 0
    %184 = vmatprep.subr.bf16.mxu0 0
    %185 = vmatpush1.bf16.msra.mxu0 0
    %186 = vmatprep.subr.bf16.mxu0 0
    %187 = vmatpush1.bf16.msra.mxu0 0
    %188 = vmatprep.subr.bf16.mxu0 0
    %189 = vmatpush1.bf16.msra.mxu0 0
    %190 = vmatprep.subr.bf16.mxu0 0
    %191 = vmatpush1.bf16.msra.mxu0 0
    %192 = vmatprep.subr.bf16.mxu0 0
    %193 = vmatpush1.bf16.msra.mxu0 0
    %194 = vmatprep.subr.bf16.mxu0 0
    %195 = vmatpush1.bf16.msra.mxu0 0
    %196 = vmatprep.subr.bf16.mxu0 0
    %197 = vmatpush1.bf16.msra.mxu0 0
    %198 = vmatprep.subr.bf16.mxu0 0
    %199 = vmatpush1.bf16.msra.mxu0 0
    %200 = vmatprep.subr.bf16.mxu0 0
    %201 = vmatpush1.bf16.msra.mxu0 0
    %202 = vmatprep.subr.bf16.mxu0 0
    %203 = vmatpush1.bf16.msra.mxu0 0
    %204 = vmatprep.mubr.bf16.mxu0 0
    %205 = vmatmul.mubr.bf16.gmra.mrb[0].mxu0 %v167
    %v206 = vpop.f32.mrb[0].mxu0
    %v207 = vadd.f32 %v123, %v206
    %v208 = vpop.f32.mrb[0].mxu0
    %v209 = vadd.f32 %v125, %v208
    %v210 = vpop.f32.mrb[0].mxu0
    %v211 = vadd.f32 %v127, %v210
    %v212 = vpop.f32.mrb[0].mxu0
    %v213 = vadd.f32 %v129, %v212
    %214 = vmatprep.mubr.bf16.mxu0 0
    %215 = vmatmul.mubr.bf16.gmra.mrb[0].mxu0 %v170
    %v216 = vpop.f32.mrb[0].mxu0
    %v217 = vadd.f32 %v133, %v216
    %v218 = vpop.f32.mrb[0].mxu0
    %v219 = vadd.f32 %v135, %v218
    %v220 = vpop.f32.mrb[0].mxu0
    %v221 = vadd.f32 %v137, %v220
    %v222 = vpop.f32.mrb[0].mxu0
    %v223 = vadd.f32 %v139, %v222
    %224 = vdwg.mxu0
    %v225 = vstv %s149
    %v226 = vmul.f32 %v225, %v51
    %v227 = vmul.f32 %v225, %v52
    %v228 = vmul.f32 %v225, %v53
    %v229 = vmul.f32 %v225, %v54
    %231 = vset.pattern.permute.xlu0 0
    %232 = vperm.xlu0 %231, %v226
    %v233 = vpop.permute.xlu0 %232
    %236 = vset.pattern.permute.xlu0 0
    %237 = vperm.xlu0 %236, %v227
    %v238 = vpop.permute.xlu0 %237
    %241 = vset.pattern.permute.xlu0 0
    %242 = vperm.xlu0 %241, %v228
    %v243 = vpop.permute.xlu0 %242
    %246 = vset.pattern.permute.xlu0 0
    %247 = vperm.xlu0 %246, %v229
    %v248 = vpop.permute.xlu0 %247
    %v250 = vadd.f32 %v207, %v233
    %v251 = vadd.f32 %v209, %v233
    %v252 = vadd.f32 %v211, %v238
    %v253 = vadd.f32 %v213, %v238
    %v254 = vadd.f32 %v217, %v243
    %v255 = vadd.f32 %v219, %v243
    %v256 = vadd.f32 %v221, %v248
    %v257 = vadd.f32 %v223, %v248
    %v258 = vtanh.pop %v250
    %v259 = vtanh.pop %v251
    %v260 = vtanh.pop %v252
    %v261 = vtanh.pop %v253
    %v262 = vtanh.pop %v254
    %v263 = vtanh.pop %v255
    %v264 = vtanh.pop %v256
    %v265 = vtanh.pop %v257
    %v267 = vlaneseq
    %v268 = vshrl.u32 %v267, 7
    %v269 = vsub.s32 0, %v268
    %v270 = vrot.slane %v50, %v269
    %v271 = vlaneseq
    %v272 = vshrl.u32 %v271, 7
    %v273 = vsub.s32 1, %v272
    %v274 = vrot.slane %v50, %v273
    %v277 = vmul.f32 %v258, %v270
    %v278 = vmul.f32 %v259, %v274
    %v279 = vmul.f32 %v260, %v270
    %v280 = vmul.f32 %v261, %v274
    %v281 = vmul.f32 %v262, %v270
    %v282 = vmul.f32 %v263, %v274
    %v283 = vmul.f32 %v264, %v270
    %v284 = vmul.f32 %v265, %v274
    %v285 = vstv %s151
    %v286 = vmul.f32 %v285, %v277
    %v287 = vmul.f32 %v285, %v278
    %v288 = vmul.f32 %v285, %v279
    %v289 = vmul.f32 %v285, %v280
    %v290 = vmul.f32 %v285, %v281
    %v291 = vmul.f32 %v285, %v282
    %v292 = vmul.f32 %v285, %v283
    %v293 = vmul.f32 %v285, %v284
    %v294 = vadd.f32 %v141, %v286
    %v295 = vadd.f32 %v142, %v287
    %v296 = vadd.f32 %v143, %v288
    %v297 = vadd.f32 %v144, %v289
    %v298 = vadd.f32 %v145, %v290
    %v299 = vadd.f32 %v146, %v291
    %v300 = vadd.f32 %v147, %v292
    %v301 = vadd.f32 %v148, %v293
    %s302 = sadd.f32 %s149, %s151
    %s303 = sld [smem:[#allocation3 + $0x2]]
    %s304 = ssub.f32 %s303, %s302
    %v305 = vpack.c.bf16 %v296, %v294
    %v306 = vpack.c.bf16 %v297, %v295
    %v307 = vpack.c.bf16 %v300, %v298
    %v308 = vpack.c.bf16 %v301, %v299
    %309 = vmatprep.subr.bf16.mxu0 %v306
    %310 = vmatpush1.bf16.msra.mxu0 %v305
    %311 = vmatprep.subr.bf16.mxu0 %v308
    %312 = vmatpush1.bf16.msra.mxu0 %v307
    %313 = vmatprep.subr.bf16.mxu0 0
    %314 = vmatpush1.bf16.msra.mxu0 0
    %315 = vmatprep.subr.bf16.mxu0 0
    %316 = vmatpush1.bf16.msra.mxu0 0
    %317 = vmatprep.subr.bf16.mxu0 0
    %318 = vmatpush1.bf16.msra.mxu0 0
    %319 = vmatprep.subr.bf16.mxu0 0
    %320 = vmatpush1.bf16.msra.mxu0 0
    %321 = vmatprep.subr.bf16.mxu0 0
    %322 = vmatpush1.bf16.msra.mxu0 0
    %323 = vmatprep.subr.bf16.mxu0 0
    %324 = vmatpush1.bf16.msra.mxu0 0
    %325 = vmatprep.subr.bf16.mxu0 0
    %326 = vmatpush1.bf16.msra.mxu0 0
    %327 = vmatprep.subr.bf16.mxu0 0
    %328 = vmatpush1.bf16.msra.mxu0 0
    %329 = vmatprep.subr.bf16.mxu0 0
    %330 = vmatpush1.bf16.msra.mxu0 0
    %331 = vmatprep.subr.bf16.mxu0 0
    %332 = vmatpush1.bf16.msra.mxu0 0
    %333 = vmatprep.subr.bf16.mxu0 0
    %334 = vmatpush1.bf16.msra.mxu0 0
    %335 = vmatprep.subr.bf16.mxu0 0
    %336 = vmatpush1.bf16.msra.mxu0 0
    %337 = vmatprep.subr.bf16.mxu0 0
    %338 = vmatpush1.bf16.msra.mxu0 0
    %339 = vmatprep.subr.bf16.mxu0 0
    %340 = vmatpush1.bf16.msra.mxu0 0
    %341 = vmatprep.mubr.bf16.mxu0 0
    %342 = vmatmul.mubr.bf16.gmra.mrb[0].mxu0 %v167
    %v343 = vpop.f32.mrb[0].mxu0
    %v344 = vadd.f32 %v123, %v343
    %v345 = vpop.f32.mrb[0].mxu0
    %v346 = vadd.f32 %v125, %v345
    %v347 = vpop.f32.mrb[0].mxu0
    %v348 = vadd.f32 %v127, %v347
    %v349 = vpop.f32.mrb[0].mxu0
    %v350 = vadd.f32 %v129, %v349
    %351 = vmatprep.mubr.bf16.mxu0 0
    %352 = vmatmul.mubr.bf16.gmra.mrb[0].mxu0 %v170
    %v353 = vpop.f32.mrb[0].mxu0
    %v354 = vadd.f32 %v133, %v353
    %v355 = vpop.f32.mrb[0].mxu0
    %v356 = vadd.f32 %v135, %v355
    %v357 = vpop.f32.mrb[0].mxu0
    %v358 = vadd.f32 %v137, %v357
    %v359 = vpop.f32.mrb[0].mxu0
    %v360 = vadd.f32 %v139, %v359
    %361 = vdwg.mxu0
    %v362 = vstv %s302
    %v363 = vmul.f32 %v362, %v51
    %v364 = vmul.f32 %v362, %v52
    %v365 = vmul.f32 %v362, %v53
    %v366 = vmul.f32 %v362, %v54
    %368 = vset.pattern.permute.xlu0 0
    %369 = vperm.xlu0 %368, %v363
    %v370 = vpop.permute.xlu0 %369
    %373 = vset.pattern.permute.xlu0 0
    %374 = vperm.xlu0 %373, %v364
    %v375 = vpop.permute.xlu0 %374
    %378 = vset.pattern.permute.xlu0 0
    %379 = vperm.xlu0 %378, %v365
    %v380 = vpop.permute.xlu0 %379
    %383 = vset.pattern.permute.xlu0 0
    %384 = vperm.xlu0 %383, %v366
    %v385 = vpop.permute.xlu0 %384
    %v387 = vadd.f32 %v344, %v370
    %v388 = vadd.f32 %v346, %v370
    %v389 = vadd.f32 %v348, %v375
    %v390 = vadd.f32 %v350, %v375
    %v391 = vadd.f32 %v354, %v380
    %v392 = vadd.f32 %v356, %v380
    %v393 = vadd.f32 %v358, %v385
    %v394 = vadd.f32 %v360, %v385
    %v395 = vtanh.pop %v387
    %v396 = vtanh.pop %v388
    %v397 = vtanh.pop %v389
    %v398 = vtanh.pop %v390
    %v399 = vtanh.pop %v391
    %v400 = vtanh.pop %v392
    %v401 = vtanh.pop %v393
    %v402 = vtanh.pop %v394
    %v403 = vmul.f32 %v395, %v270
    %v404 = vmul.f32 %v396, %v274
    %v405 = vmul.f32 %v397, %v270
    %v406 = vmul.f32 %v398, %v274
    %v407 = vmul.f32 %v399, %v270
    %v408 = vmul.f32 %v400, %v274
    %v409 = vmul.f32 %v401, %v270
    %v410 = vmul.f32 %v402, %v274
    %v411 = vstv %s304
    %v412 = vmul.f32 %v411, %v403
    %v413 = vmul.f32 %v411, %v404
    %v414 = vmul.f32 %v411, %v405
    %v415 = vmul.f32 %v411, %v406
    %v416 = vmul.f32 %v411, %v407
    %v417 = vmul.f32 %v411, %v408
    %v418 = vmul.f32 %v411, %v409
    %v419 = vmul.f32 %v411, %v410
    %v420 = vadd.f32 %v294, %v412
    %v421 = vadd.f32 %v295, %v413
    %v422 = vadd.f32 %v296, %v414
    %v423 = vadd.f32 %v297, %v415
    %v424 = vadd.f32 %v298, %v416
    %v425 = vadd.f32 %v299, %v417
    %v426 = vadd.f32 %v300, %v418
    %v427 = vadd.f32 %v301, %v419
    %s428 = sadd.f32 %s302, %s304
    %s429 = sld [smem:[#allocation3 + $0x3]]
    %s430 = ssub.f32 %s429, %s428
    %v431 = vpack.c.bf16 %v422, %v420
    %v432 = vpack.c.bf16 %v423, %v421
    %v433 = vpack.c.bf16 %v426, %v424
    %v434 = vpack.c.bf16 %v427, %v425
    %435 = vmatprep.subr.bf16.mxu0 %v432
    %436 = vmatpush1.bf16.msra.mxu0 %v431
    %437 = vmatprep.subr.bf16.mxu0 %v434
    %438 = vmatpush1.bf16.msra.mxu0 %v433
    %439 = vmatprep.subr.bf16.mxu0 0
    %440 = vmatpush1.bf16.msra.mxu0 0
    %441 = vmatprep.subr.bf16.mxu0 0
    %442 = vmatpush1.bf16.msra.mxu0 0
    %443 = vmatprep.subr.bf16.mxu0 0
    %444 = vmatpush1.bf16.msra.mxu0 0
    %445 = vmatprep.subr.bf16.mxu0 0
    %446 = vmatpush1.bf16.msra.mxu0 0
    %447 = vmatprep.subr.bf16.mxu0 0
    %448 = vmatpush1.bf16.msra.mxu0 0
    %449 = vmatprep.subr.bf16.mxu0 0
    %450 = vmatpush1.bf16.msra.mxu0 0
    %451 = vmatprep.subr.bf16.mxu0 0
    %452 = vmatpush1.bf16.msra.mxu0 0
    %453 = vmatprep.subr.bf16.mxu0 0
    %454 = vmatpush1.bf16.msra.mxu0 0
    %455 = vmatprep.subr.bf16.mxu0 0
    %456 = vmatpush1.bf16.msra.mxu0 0
    %457 = vmatprep.subr.bf16.mxu0 0
    %458 = vmatpush1.bf16.msra.mxu0 0
    %459 = vmatprep.subr.bf16.mxu0 0
    %460 = vmatpush1.bf16.msra.mxu0 0
    %461 = vmatprep.subr.bf16.mxu0 0
    %462 = vmatpush1.bf16.msra.mxu0 0
    %463 = vmatprep.subr.bf16.mxu0 0
    %464 = vmatpush1.bf16.msra.mxu0 0
    %465 = vmatprep.subr.bf16.mxu0 0
    %466 = vmatpush1.bf16.msra.mxu0 0
    %467 = vmatprep.mubr.bf16.mxu0 0
    %468 = vmatmul.mubr.bf16.gmra.mrb[0].mxu0 %v167
    %v469 = vpop.f32.mrb[0].mxu0
    %v470 = vadd.f32 %v123, %v469
    %v471 = vpop.f32.mrb[0].mxu0
    %v472 = vadd.f32 %v125, %v471
    %v473 = vpop.f32.mrb[0].mxu0
    %v474 = vadd.f32 %v127, %v473
    %v475 = vpop.f32.mrb[0].mxu0
    %v476 = vadd.f32 %v129, %v475
    %477 = vmatprep.mubr.bf16.mxu0 0
    %478 = vmatmul.mubr.bf16.gmra.mrb[0].mxu0 %v170
    %v479 = vpop.f32.mrb[0].mxu0
    %v480 = vadd.f32 %v133, %v479
    %v481 = vpop.f32.mrb[0].mxu0
    %v482 = vadd.f32 %v135, %v481
    %v483 = vpop.f32.mrb[0].mxu0
    %v484 = vadd.f32 %v137, %v483
    %v485 = vpop.f32.mrb[0].mxu0
    %v486 = vadd.f32 %v139, %v485
    %487 = vdwg.mxu0
    %v488 = vstv %s428
    %v489 = vmul.f32 %v488, %v51
    %v490 = vmul.f32 %v488, %v52
    %v491 = vmul.f32 %v488, %v53
    %v492 = vmul.f32 %v488, %v54
    %494 = vset.pattern.permute.xlu0 0
    %495 = vperm.xlu0 %494, %v489
    %v496 = vpop.permute.xlu0 %495
    %499 = vset.pattern.permute.xlu0 0
    %500 = vperm.xlu0 %499, %v490
    %v501 = vpop.permute.xlu0 %500
    %504 = vset.pattern.permute.xlu0 0
    %505 = vperm.xlu0 %504, %v491
    %v506 = vpop.permute.xlu0 %505
    %509 = vset.pattern.permute.xlu0 0
    %510 = vperm.xlu0 %509, %v492
    %v511 = vpop.permute.xlu0 %510
    %v513 = vadd.f32 %v470, %v496
    %v514 = vadd.f32 %v472, %v496
    %v515 = vadd.f32 %v474, %v501
    %v516 = vadd.f32 %v476, %v501
    %v517 = vadd.f32 %v480, %v506
    %v518 = vadd.f32 %v482, %v506
    %v519 = vadd.f32 %v484, %v511
    %v520 = vadd.f32 %v486, %v511
    %v521 = vtanh.pop %v513
    %v522 = vtanh.pop %v514
    %v523 = vtanh.pop %v515
    %v524 = vtanh.pop %v516
    %v525 = vtanh.pop %v517
    %v526 = vtanh.pop %v518
    %v527 = vtanh.pop %v519
    %v528 = vtanh.pop %v520
    %v529 = vmul.f32 %v521, %v270
    %v530 = vmul.f32 %v522, %v274
    %v531 = vmul.f32 %v523, %v270
    %v532 = vmul.f32 %v524, %v274
    %v533 = vmul.f32 %v525, %v270
    %v534 = vmul.f32 %v526, %v274
    %v535 = vmul.f32 %v527, %v270
    %v536 = vmul.f32 %v528, %v274
    %v537 = vstv %s430
    %v538 = vmul.f32 %v537, %v529
    %v539 = vmul.f32 %v537, %v530
    %v540 = vmul.f32 %v537, %v531
    %v541 = vmul.f32 %v537, %v532
    %v542 = vmul.f32 %v537, %v533
    %v543 = vmul.f32 %v537, %v534
    %v544 = vmul.f32 %v537, %v535
    %v545 = vmul.f32 %v537, %v536
    %v546 = vadd.f32 %v420, %v538
    %v547 = vadd.f32 %v421, %v539
    %v548 = vadd.f32 %v422, %v540
    %v549 = vadd.f32 %v423, %v541
    %v550 = vadd.f32 %v424, %v542
    %v551 = vadd.f32 %v425, %v543
    %v552 = vadd.f32 %v426, %v544
    %v553 = vadd.f32 %v427, %v545
    %s554 = sadd.f32 %s428, %s430
    %s555 = sld [smem:[#allocation3 + $0x4]]
    %s556 = ssub.f32 %s555, %s554
    %v557 = vpack.c.bf16 %v548, %v546
    %v558 = vpack.c.bf16 %v549, %v547
    %v559 = vpack.c.bf16 %v552, %v550
    %v560 = vpack.c.bf16 %v553, %v551
    %561 = vmatprep.subr.bf16.mxu0 %v558
    %562 = vmatpush1.bf16.msra.mxu0 %v557
    %563 = vmatprep.subr.bf16.mxu0 %v560
    %564 = vmatpush1.bf16.msra.mxu0 %v559
    %565 = vmatprep.subr.bf16.mxu0 0
    %566 = vmatpush1.bf16.msra.mxu0 0
    %567 = vmatprep.subr.bf16.mxu0 0
    %568 = vmatpush1.bf16.msra.mxu0 0
    %569 = vmatprep.subr.bf16.mxu0 0
    %570 = vmatpush1.bf16.msra.mxu0 0
    %571 = vmatprep.subr.bf16.mxu0 0
    %572 = vmatpush1.bf16.msra.mxu0 0
    %573 = vmatprep.subr.bf16.mxu0 0
    %574 = vmatpush1.bf16.msra.mxu0 0
    %575 = vmatprep.subr.bf16.mxu0 0
    %576 = vmatpush1.bf16.msra.mxu0 0
    %577 = vmatprep.subr.bf16.mxu0 0
    %578 = vmatpush1.bf16.msra.mxu0 0
    %579 = vmatprep.subr.bf16.mxu0 0
    %580 = vmatpush1.bf16.msra.mxu0 0
    %581 = vmatprep.subr.bf16.mxu0 0
    %582 = vmatpush1.bf16.msra.mxu0 0
    %583 = vmatprep.subr.bf16.mxu0 0
    %584 = vmatpush1.bf16.msra.mxu0 0
    %585 = vmatprep.subr.bf16.mxu0 0
    %586 = vmatpush1.bf16.msra.mxu0 0
    %587 = vmatprep.subr.bf16.mxu0 0
    %588 = vmatpush1.bf16.msra.mxu0 0
    %589 = vmatprep.subr.bf16.mxu0 0
    %590 = vmatpush1.bf16.msra.mxu0 0
    %591 = vmatprep.subr.bf16.mxu0 0
    %592 = vmatpush1.bf16.msra.mxu0 0
    %593 = vmatprep.mubr.bf16.mxu0 0
    %594 = vmatmul.mubr.bf16.gmra.mrb[0].mxu0 %v167
    %v595 = vpop.f32.mrb[0].mxu0
    %v596 = vadd.f32 %v123, %v595
    %v597 = vpop.f32.mrb[0].mxu0
    %v598 = vadd.f32 %v125, %v597
    %v599 = vpop.f32.mrb[0].mxu0
    %v600 = vadd.f32 %v127, %v599
    %v601 = vpop.f32.mrb[0].mxu0
    %v602 = vadd.f32 %v129, %v601
    %603 = vmatprep.mubr.bf16.mxu0 0
    %604 = vmatmul.mubr.bf16.gmra.mrb[0].mxu0 %v170
    %v605 = vpop.f32.mrb[0].mxu0
    %v606 = vadd.f32 %v133, %v605
    %v607 = vpop.f32.mrb[0].mxu0
    %v608 = vadd.f32 %v135, %v607
    %v609 = vpop.f32.mrb[0].mxu0
    %v610 = vadd.f32 %v137, %v609
    %v611 = vpop.f32.mrb[0].mxu0
    %v612 = vadd.f32 %v139, %v611
    %613 = vdwg.mxu0
    %v614 = vstv %s554
    %v615 = vmul.f32 %v614, %v51
    %v616 = vmul.f32 %v614, %v52
    %v617 = vmul.f32 %v614, %v53
    %v618 = vmul.f32 %v614, %v54
    %620 = vset.pattern.permute.xlu0 0
    %621 = vperm.xlu0 %620, %v615
    %v622 = vpop.permute.xlu0 %621
    %625 = vset.pattern.permute.xlu0 0
    %626 = vperm.xlu0 %625, %v616
    %v627 = vpop.permute.xlu0 %626
    %630 = vset.pattern.permute.xlu0 0
    %631 = vperm.xlu0 %630, %v617
    %v632 = vpop.permute.xlu0 %631
    %635 = vset.pattern.permute.xlu0 0
    %636 = vperm.xlu0 %635, %v618
    %v637 = vpop.permute.xlu0 %636
    %v639 = vadd.f32 %v596, %v622
    %v640 = vadd.f32 %v598, %v622
    %v641 = vadd.f32 %v600, %v627
    %v642 = vadd.f32 %v602, %v627
    %v643 = vadd.f32 %v606, %v632
    %v644 = vadd.f32 %v608, %v632
    %v645 = vadd.f32 %v610, %v637
    %v646 = vadd.f32 %v612, %v637
    %v647 = vtanh.pop %v639
    %v648 = vtanh.pop %v640
    %v649 = vtanh.pop %v641
    %v650 = vtanh.pop %v642
    %v651 = vtanh.pop %v643
    %v652 = vtanh.pop %v644
    %v653 = vtanh.pop %v645
    %v654 = vtanh.pop %v646
    %v655 = vmul.f32 %v647, %v270
    %v656 = vmul.f32 %v648, %v274
    %v657 = vmul.f32 %v649, %v270
    %v658 = vmul.f32 %v650, %v274
    %v659 = vmul.f32 %v651, %v270
    %v660 = vmul.f32 %v652, %v274
    %v661 = vmul.f32 %v653, %v270
    %v662 = vmul.f32 %v654, %v274
    %v663 = vstv %s556
    %v664 = vmul.f32 %v663, %v655
    %v665 = vmul.f32 %v663, %v656
    %v666 = vmul.f32 %v663, %v657
    %v667 = vmul.f32 %v663, %v658
    %v668 = vmul.f32 %v663, %v659
    %v669 = vmul.f32 %v663, %v660
    %v670 = vmul.f32 %v663, %v661
    %v671 = vmul.f32 %v663, %v662
    %v672 = vadd.f32 %v546, %v664
    %v673 = vadd.f32 %v547, %v665
    %v674 = vadd.f32 %v548, %v666
    %v675 = vadd.f32 %v549, %v667
    %v676 = vadd.f32 %v550, %v668
    %v677 = vadd.f32 %v551, %v669
    %v678 = vadd.f32 %v552, %v670
    %v679 = vadd.f32 %v553, %v671
    %680 = vst [vmem:[#allocation7] sm:$0xff] %v672
    %681 = vst [vmem:[#allocation7 + $0x8] sm:$0xff] %v673
    %682 = vst [vmem:[#allocation7 + $0x10] sm:$0xff] %v674
    %683 = vst [vmem:[#allocation7 + $0x18] sm:$0xff] %v675
    %684 = vst [vmem:[#allocation7 + $0x20] sm:$0xff] %v676
    %685 = vst [vmem:[#allocation7 + $0x28] sm:$0xff] %v677
    %686 = vst [vmem:[#allocation7 + $0x30] sm:$0xff] %v678
    %687 = vst [vmem:[#allocation7 + $0x38] sm:$0xff] %v679
    // Predicated region
    $region30: #{tpu_custom_call.1} parent=1 // pred_check
      _
    $region31: #{tpu_custom_call.1} parent=1 // pred_check_branch
      %689 = sbr.rel (0) target = $region33
    $region32: #{tpu_custom_call.1} parent=1 // pred_region
      %s691 = ssub.s32 1024, 1024
      %692 = vsyncadd [#allocation6], %s691
      %s693 = sshll.u32 [#allocation7], 4
      %s694 = int_to_ptr.vmem [resolvable:$true] %s693
      %699 = dma.vmem_to_hbm [thread:$0]  %s694, 1024, %s7, [#allocation6], 256, 256, 16
    $region33: #{tpu_custom_call.1} parent=1 // pred_fallthru
      _
    // Predicated region
    $region34: #{tpu_custom_call.1} parent=1 // pred_check
      _
    $region35: #{tpu_custom_call.1} parent=1 // pred_check_branch
      %701 = sbr.rel (0) target = $region37
    $region36: #{tpu_custom_call.1} parent=1 // pred_region
      %702 = dma.done [#allocation6], 1024
    $region37: #{tpu_custom_call.1} parent=1 // pred_fallthru
      _
    %703 = vsyncpa [#allocation5], 1
    %704 = vsyncpa [#allocation6], 1

</llo_original>
